<compile_context>
chip_gen: v5e
topology: v5e:2x2
jax: 0.10.0
libtpu: 0.0.40
codegen_flags: <defaults>
</compile_context>

<pallas_src>
import functools

import jax
import jax.numpy as jnp
from jax import lax
from jax.experimental import pallas as pl
from jax.experimental.pallas import tpu as pltpu


def _dist_linear_kernel(x_ref, v_ref, g_ref, o_ref, acc_ref, xsq_ref, vsq_ref,
                        *, scale):
    """One (TM, TN) output tile, accumulated over the K (feature) grid axis."""
    k = pl.program_id(2)

    @pl.when(k == 0)
    def _init():
        acc_ref[...] = jnp.zeros_like(acc_ref)
        xsq_ref[...] = jnp.zeros_like(xsq_ref)
        vsq_ref[...] = jnp.zeros_like(vsq_ref)

    x = x_ref[...]          # [TM, TK], native dtype (bf16 or f32), no upcast
    v = v_ref[...]          # [TN, TK]

    # MXU: contract the shared feature axis of both operands (A @ B.T without
    # materializing B.T).
    acc_ref[...] += lax.dot_general(
        x, v,
        dimension_numbers=(((1,), (1,)), ((), ())),
        preferred_element_type=jnp.float32,
    )

    # Per-K-tile partial sums of squares -- they ride the tiles that are
    # already in VMEM for the matmul (no second pass over HBM for the norms).
    xf = x.astype(jnp.float32)
    vf = v.astype(jnp.float32)
    xsq_ref[...] += jnp.sum(xf * xf, axis=1, keepdims=True)           # [TM, 1]
    # Row sum-of-squares of v produced *lane-major* ([8, TN], identical rows)
    # via a ones-matvec on the MXU, so no [TN,1] -> [1,TN] transpose is needed
    # when scaling the output columns at finalize time.
    ones = jnp.ones((8, vf.shape[1]), jnp.float32)
    vsq_ref[...] += lax.dot_general(
        ones, vf * vf,
        dimension_numbers=(((1,), (1,)), ((), ())),
        preferred_element_type=jnp.float32,
    )

    @pl.when(k == pl.num_programs(2) - 1)
    def _finalize():
        g = g_ref[...].astype(jnp.float32)                 # [1, TN]
        # torch eps placement preserved: x / (||x|| + 1e-5).
        inv_x = 1.0 / (jnp.sqrt(xsq_ref[...]) + 1e-5)      # [TM, 1]
        inv_v = lax.rsqrt(vsq_ref[0:1, :])                 # [1, TN]  (EUP)
        col = (scale * g) * inv_v                          # fold scale in here
        o_ref[...] = (acc_ref[...] * inv_x * col).astype(o_ref.dtype)


def _round_up(a, m):
    return (a + m - 1) // m * m


def dist_linear(x, v, g, *, tm=None, tn=None, tk=None):
    """x: [B, C_in]; v: [C_out, C_in]; g: [C_out, 1] -> scores [B, C_out] f32."""
    B, C_in = x.shape
    C_out, C_in2 = v.shape
    assert C_in == C_in2, "feature dims of x and v must match"
    g = jnp.reshape(g, (1, C_out))                 # lane-major gain vector
    scale = 2.0 if C_out <= 200 else 10.0

    # Tile sizes: 128-aligned lane dims (N, K), sublane-aligned M.  The
    # 256/512 defaults keep the double-buffered VMEM footprint ~1-2 MiB,
    # comfortably inside v7x's smaller VMEM as well as v5e/v6e budgets.
    tm = tm if tm is not None else min(256, _round_up(B, 8))
    tn = tn if tn is not None else min(256, _round_up(C_out, 128))
    tk = tk if tk is not None else min(512, _round_up(C_in, 128))

    Bp = _round_up(B, tm)
    Np = _round_up(C_out, tn)
    Kp = _round_up(C_in, tk)

    xp = x if (Bp == B and Kp == C_in) else jnp.pad(x, ((0, Bp - B), (0, Kp - C_in)))
    vp = v if (Np == C_out and Kp == C_in) else jnp.pad(v, ((0, Np - C_out), (0, Kp - C_in)))
    gp = g if Np == C_out else jnp.pad(g, ((0, 0), (0, Np - C_out)))

    grid = (Bp // tm, Np // tn, Kp // tk)
    kernel = functools.partial(_dist_linear_kernel, scale=scale)

    out = pl.pallas_call(
        kernel,
        out_shape=jax.ShapeDtypeStruct((Bp, Np), jnp.float32),
        grid_spec=pltpu.PrefetchScalarGridSpec(
            num_scalar_prefetch=0,
            grid=grid,
            in_specs=[
                pl.BlockSpec((tm, tk), lambda i, j, k: (i, k)),   # x tile
                pl.BlockSpec((tn, tk), lambda i, j, k: (j, k)),   # v tile
                pl.BlockSpec((1, tn), lambda i, j, k: (0, j)),    # g (lane-major)
            ],
            out_specs=pl.BlockSpec((tm, tn), lambda i, j, k: (i, j)),
            scratch_shapes=[
                pltpu.VMEM((tm, tn), jnp.float32),   # matmul accumulator
                pltpu.VMEM((tm, 1), jnp.float32),    # sum(x*x) per row
                pltpu.VMEM((8, tn), jnp.float32),    # sum(v*v) per row (lane-major)
            ],
        ),
        compiler_params=pltpu.CompilerParams(
            dimension_semantics=("parallel", "parallel", "arbitrary"),
            vmem_limit_bytes=32 * 1024 * 1024,
        ),
    )(xp, vp, gp)

    return out[:B, :C_out]


def reference_dist_linear(x, v, g):
    """Pure-JAX reference mirroring the PyTorch DistLinear forward."""
    scale = 2.0 if v.shape[0] <= 200 else 10.0
    x_n = x / (jnp.linalg.norm(x, axis=1, keepdims=True) + 1e-5)
    w = jnp.reshape(g, (-1, 1)) * v / jnp.linalg.norm(v, axis=1, keepdims=True)
    return scale * jnp.dot(x_n, w.T, precision=lax.Precision.HIGHEST)


if __name__ == "__main__":
    key = jax.random.PRNGKey(0)
    k1, k2, k3, k4 = jax.random.split(key, 4)

    # Case 1: tiny head (out_channel <= 200 -> scale 2); pads up to one tile.
    B, C_in, C_out = 8, 32, 16
    x = jax.random.normal(k1, (B, C_in), dtype=jnp.float32)
    v = jax.random.normal(k2, (C_out, C_in), dtype=jnp.float32) * 0.1
    g = jnp.linalg.norm(v, axis=1, keepdims=True)       # weight_norm init: g = ||v||
    out = jax.block_until_ready(dist_linear(x, v, g))
    ref = reference_dist_linear(x, v, g)
    assert out.shape == (B, C_out)
    assert jnp.allclose(out, ref, atol=1e-4, rtol=1e-3), (
        f"case1 max abs err {jnp.max(jnp.abs(out - ref))}")

    # Case 2: exercises the multi-tile path (2x2x2 grid, K accumulation,
    # scale-10 branch) with deliberately small tiles.
    B, C_in, C_out = 16, 256, 256
    x = jax.random.normal(k3, (B, C_in), dtype=jnp.float32)
    v = jax.random.normal(k4, (C_out, C_in), dtype=jnp.float32) * 0.05
    g = jnp.linalg.norm(v, axis=1, keepdims=True)
    out = jax.block_until_ready(dist_linear(x, v, g, tm=8, tn=128, tk=128))
    ref = reference_dist_linear(x, v, g)
    assert out.shape == (B, C_out)
    assert jnp.allclose(out, ref, atol=1e-4, rtol=1e-3), (
        f"case2 max abs err {jnp.max(jnp.abs(out - ref))}")

    print("KERNEL_OK")
</pallas_src>

<mosaic_0001>
module attributes {stable_mosaic.version = 11 : i64} {
  func.func @_dist_linear_kernel(%arg0: i32, %arg1: i32, %arg2: i32, %arg3: memref<8x128xf32, #tpu.memory_space<vmem>>, %arg4: memref<128x128xf32, #tpu.memory_space<vmem>>, %arg5: memref<1x128xf32, #tpu.memory_space<vmem>>, %arg6: memref<8x128xf32, #tpu.memory_space<vmem>>, %arg7: memref<8x128xf32, #tpu.memory_space<vmem>>, %arg8: memref<8x1xf32, #tpu.memory_space<vmem>>, %arg9: memref<8x128xf32, #tpu.memory_space<vmem>>) attributes {dimension_semantics = [#tpu.dimension_semantics<parallel>, #tpu.dimension_semantics<parallel>, #tpu.dimension_semantics<arbitrary>], iteration_bounds = array<i64: 1, 1, 1>, scalar_prefetch = 0 : i64, scratch_operands = 3 : i64, tpu.core_type = #tpu.core_type<tc>, window_params = [{transform_indices = @transform_0, window_bounds = array<i64: 8, 128>}, {transform_indices = @transform_1, window_bounds = array<i64: 128, 128>}, {transform_indices = @transform_2, window_bounds = array<i64: 1, 128>}, {transform_indices = @transform_3, window_bounds = array<i64: 8, 128>}]} {
    %c0_i32 = arith.constant 0 : i32
    %0 = arith.cmpi eq, %arg2, %c0_i32 : i32
    %1 = arith.extui %0 : i1 to i32
    %c0_i32_0 = arith.constant 0 : i32
    %2 = arith.cmpi ne, %1, %c0_i32_0 : i32
    scf.if %2 {
      %cst_21 = arith.constant 0.000000e+00 : f32
      %24 = vector.broadcast %cst_21 : f32 to vector<8x128xf32>
      %c0_22 = arith.constant 0 : index
      %c0_23 = arith.constant 0 : index
      %25 = vector.load %arg7[%c0_22, %c0_23] : memref<8x128xf32, #tpu.memory_space<vmem>>, vector<8x128xf32>
      tpu.vector_store %arg7[%c0_22, %c0_23], %24 {strides = array<i32>} : memref<8x128xf32, #tpu.memory_space<vmem>>, vector<8x128xf32>,
      %cst_24 = arith.constant 0.000000e+00 : f32
      %26 = vector.broadcast %cst_24 : f32 to vector<8x1xf32>
      %c0_25 = arith.constant 0 : index
      %c0_26 = arith.constant 0 : index
      %27 = vector.load %arg8[%c0_25, %c0_26] : memref<8x1xf32, #tpu.memory_space<vmem>>, vector<8x1xf32>
      tpu.vector_store %arg8[%c0_25, %c0_26], %26 {strides = array<i32>} : memref<8x1xf32, #tpu.memory_space<vmem>>, vector<8x1xf32>,
      %cst_27 = arith.constant 0.000000e+00 : f32
      %28 = vector.broadcast %cst_27 : f32 to vector<8x128xf32>
      %c0_28 = arith.constant 0 : index
      %c0_29 = arith.constant 0 : index
      %29 = vector.load %arg9[%c0_28, %c0_29] : memref<8x128xf32, #tpu.memory_space<vmem>>, vector<8x128xf32>
      tpu.vector_store %arg9[%c0_28, %c0_29], %28 {strides = array<i32>} : memref<8x128xf32, #tpu.memory_space<vmem>>, vector<8x128xf32>,
    } else {
    }
    %c0 = arith.constant 0 : index
    %c0_1 = arith.constant 0 : index
    %3 = vector.load %arg3[%c0, %c0_1] : memref<8x128xf32, #tpu.memory_space<vmem>>, vector<8x128xf32>
    %c0_2 = arith.constant 0 : index
    %c0_3 = arith.constant 0 : index
    %4 = vector.load %arg4[%c0_2, %c0_3] : memref<128x128xf32, #tpu.memory_space<vmem>>, vector<128x128xf32>
    %c0_4 = arith.constant 0 : index
    %c0_5 = arith.constant 0 : index
    %5 = vector.load %arg7[%c0_4, %c0_5] : memref<8x128xf32, #tpu.memory_space<vmem>>, vector<8x128xf32>
    %cst = arith.constant dense<0.000000e+00> : vector<8x128xf32>
    %6 = tpu.matmul %3, %4, %cst {dimension_numbers = #tpu.dot_dimension_numbers<[1], [1], [0], [0], [0, 0, 1, 0], [], []>} : vector<8x128xf32>, vector<128x128xf32>, vector<8x128xf32> -> vector<8x128xf32>
    %7 = arith.addf %5, %6 : vector<8x128xf32>
    %c0_6 = arith.constant 0 : index
    %c0_7 = arith.constant 0 : index
    %8 = vector.load %arg7[%c0_6, %c0_7] : memref<8x128xf32, #tpu.memory_space<vmem>>, vector<8x128xf32>
    tpu.vector_store %arg7[%c0_6, %c0_7], %7 {strides = array<i32>} : memref<8x128xf32, #tpu.memory_space<vmem>>, vector<8x128xf32>,
    %c0_8 = arith.constant 0 : index
    %c0_9 = arith.constant 0 : index
    %9 = vector.load %arg8[%c0_8, %c0_9] : memref<8x1xf32, #tpu.memory_space<vmem>>, vector<8x1xf32>
    %10 = arith.mulf %3, %3 : vector<8x128xf32>
    %cst_10 = arith.constant dense<0.000000e+00> : vector<8xf32>
    %11 = vector.multi_reduction <add>, %10, %cst_10 [1] : vector<8x128xf32> to vector<8xf32>
    %12 = vector.shape_cast %11 : vector<8xf32> to vector<8x1xf32>
    %13 = arith.addf %9, %12 : vector<8x1xf32>
    %c0_11 = arith.constant 0 : index
    %c0_12 = arith.constant 0 : index
    %14 = vector.load %arg8[%c0_11, %c0_12] : memref<8x1xf32, #tpu.memory_space<vmem>>, vector<8x1xf32>
    tpu.vector_store %arg8[%c0_11, %c0_12], %13 {strides = array<i32>} : memref<8x1xf32, #tpu.memory_space<vmem>>, vector<8x1xf32>,
    %cst_13 = arith.constant 1.000000e+00 : f32
    %15 = vector.broadcast %cst_13 : f32 to vector<8x128xf32>
    %c0_14 = arith.constant 0 : index
    %c0_15 = arith.constant 0 : index
    %16 = vector.load %arg9[%c0_14, %c0_15] : memref<8x128xf32, #tpu.memory_space<vmem>>, vector<8x128xf32>
    %17 = arith.mulf %4, %4 : vector<128x128xf32>
    %cst_16 = arith.constant dense<0.000000e+00> : vector<8x128xf32>
    %18 = tpu.matmul %15, %17, %cst_16 {dimension_numbers = #tpu.dot_dimension_numbers<[1], [1], [0], [0], [0, 0, 1, 0], [], []>} : vector<8x128xf32>, vector<128x128xf32>, vector<8x128xf32> -> vector<8x128xf32>
    %19 = arith.addf %16, %18 : vector<8x128xf32>
    %c0_17 = arith.constant 0 : index
    %c0_18 = arith.constant 0 : index
    %20 = vector.load %arg9[%c0_17, %c0_18] : memref<8x128xf32, #tpu.memory_space<vmem>>, vector<8x128xf32>
    tpu.vector_store %arg9[%c0_17, %c0_18], %19 {strides = array<i32>} : memref<8x128xf32, #tpu.memory_space<vmem>>, vector<8x128xf32>,
    %c0_i32_19 = arith.constant 0 : i32
    %21 = arith.cmpi eq, %arg2, %c0_i32_19 : i32
    %22 = arith.extui %21 : i1 to i32
    %c0_i32_20 = arith.constant 0 : i32
    %23 = arith.cmpi ne, %22, %c0_i32_20 : i32
    scf.if %23 {
      %c0_21 = arith.constant 0 : index
      %c0_22 = arith.constant 0 : index
      %24 = vector.load %arg5[%c0_21, %c0_22] : memref<1x128xf32, #tpu.memory_space<vmem>>, vector<1x128xf32>
      %c0_23 = arith.constant 0 : index
      %c0_24 = arith.constant 0 : index
      %25 = vector.load %arg8[%c0_23, %c0_24] : memref<8x1xf32, #tpu.memory_space<vmem>>, vector<8x1xf32>
      %26 = math.sqrt %25 : vector<8x1xf32>
      %cst_25 = arith.constant 9.99999974E-6 : f32
      %27 = vector.broadcast %cst_25 : f32 to vector<8x1xf32>
      %28 = arith.addf %26, %27 : vector<8x1xf32>
      %cst_26 = arith.constant 1.000000e+00 : f32
      %29 = vector.broadcast %cst_26 : f32 to vector<8x1xf32>
      %30 = arith.divf %29, %28 : vector<8x1xf32>
      %c0_27 = arith.constant 0 : index
      %c0_28 = arith.constant 0 : index
      %31 = vector.load %arg9[%c0_27, %c0_28] : memref<8x128xf32, #tpu.memory_space<vmem>>, vector<1x128xf32>
      %32 = math.rsqrt %31 : vector<1x128xf32>
      %cst_29 = arith.constant 2.000000e+00 : f32
      %33 = vector.broadcast %cst_29 : f32 to vector<1x128xf32>
      %34 = arith.mulf %33, %24 : vector<1x128xf32>
      %35 = arith.mulf %34, %32 : vector<1x128xf32>
      %c0_30 = arith.constant 0 : index
      %c0_31 = arith.constant 0 : index
      %36 = vector.load %arg7[%c0_30, %c0_31] : memref<8x128xf32, #tpu.memory_space<vmem>>, vector<8x128xf32>
      %37 = vector.broadcast %30 : vector<8x1xf32> to vector<8x128xf32>
      %38 = arith.mulf %36, %37 : vector<8x128xf32>
      %39 = vector.broadcast %35 : vector<1x128xf32> to vector<8x128xf32>
      %40 = arith.mulf %38, %39 : vector<8x128xf32>
      %c0_32 = arith.constant 0 : index
      %c0_33 = arith.constant 0 : index
      %41 = vector.load %arg6[%c0_32, %c0_33] : memref<8x128xf32, #tpu.memory_space<vmem>>, vector<8x128xf32>
      tpu.vector_store %arg6[%c0_32, %c0_33], %40 {strides = array<i32>} : memref<8x128xf32, #tpu.memory_space<vmem>>, vector<8x128xf32>,
    } else {
    }
    return
  }
  func.func @transform_0(%arg0: i32, %arg1: i32, %arg2: i32) -> (i32, i32) {
    %c0_i32 = arith.constant 0 : i32
    return %arg0, %arg2 : i32, i32
  }
  func.func @transform_1(%arg0: i32, %arg1: i32, %arg2: i32) -> (i32, i32) {
    %c0_i32 = arith.constant 0 : i32
    return %arg1, %arg2 : i32, i32
  }
  func.func @transform_2(%arg0: i32, %arg1: i32, %arg2: i32) -> (i32, i32) {
    %c0_i32 = arith.constant 0 : i32
    %c0_i32_0 = arith.constant 0 : i32
    return %c0_i32, %arg1 : i32, i32
  }
  func.func @transform_3(%arg0: i32, %arg1: i32, %arg2: i32) -> (i32, i32) {
    %c0_i32 = arith.constant 0 : i32
    return %arg0, %arg1 : i32, i32
  }
}

</mosaic_0001>

<llo_original>
// kernel: tpu_custom_call.1
$region0: #{tpu_custom_call.1}
  #allocation0 [shape = 'u32[]', space=smem, size = 0x4, offset = 0x4, fixed_abs, tag = 'smem constant byte address 0x4 - core index']
  #allocation1 [shape = 'u32[72,128]{1,0:T(1,128)}', space=vmem, size = 0x9000, scoped, tag = 'internal scratch']
  #allocation2 [shape = 'f32[8,128]{1,0:T(8,128)}', space=vmem, size = 0x1000, scoped, tag = 'scratch operand']
  #allocation3 [shape = 'f32[8,1]{1,0:T(8,128)}', space=vmem, size = 0x1000, scoped, tag = 'scratch operand']
  #allocation4 [shape = 'f32[8,128]{1,0:T(8,128)}', space=vmem, size = 0x1000, scoped, tag = 'scratch operand']
  %s0 = inlined_call_operand.hbm [shape: f32[8,128], index: 0, kind: input, shape index: {}]
  %s1 = inlined_call_operand.hbm [shape: f32[128,128], index: 1, kind: input, shape index: {}]
  %s2 = inlined_call_operand.vmem [shape: f32[1,128], index: 2, kind: input, shape index: {}]
  %s3 = inlined_call_operand.hbm [shape: f32[8,128], index: 3, kind: output, shape index: {}]
  %s4 = sld [smem:[#allocation0]]
  $region38: #{tpu_custom_call.1} parent=0
    _
  %s6 = ssub.s32 1, %s4
  %s7 = scalar_select 0, %s6, %s4
  $region1: #{tpu_custom_call.1} parent=0
    #allocation5 [shape = 'u8[4096]{0}', space=vmem, size = 0x1000, scoped, tag = 'input window, operand 0, single buffered']
    #allocation6 [shape = 's32[1]{0}', space=sflag, size = 0x4, scoped, tag = 'scoped memory for tpu_custom_call.1']
    #allocation7 [shape = 's32[1]{0}', space=sflag, size = 0x4, scoped, tag = 'scoped memory for tpu_custom_call.1']
    #allocation8 [shape = 'u8[65536]{0}', space=vmem, size = 0x10000, scoped, tag = 'input window, operand 1, single buffered']
    #allocation9 [shape = 's32[1]{0}', space=sflag, size = 0x4, scoped, tag = 'scoped memory for tpu_custom_call.1']
    #allocation10 [shape = 'u8[4096]{0}', space=vmem, size = 0x1000, scoped, tag = 'output window, operand 0, single buffered']
    %8 = vsyncpa [#allocation6], 0
    %9 = vsyncpa [#allocation9], 0
    %10 = vsyncpa [#allocation7], 0
    // Predicated region
    $region2: #{tpu_custom_call.1} parent=1 // pred_check
      _
    $region3: #{tpu_custom_call.1} parent=1 // pred_check_branch
      %12 = sbr.rel (0) target = $region5
    $region4: #{tpu_custom_call.1} parent=1 // pred_region
      %14 = vsyncadd [#allocation6], 0
      %s16 = sshll.u32 %s0, 4
      %s17 = int_to_ptr.hbm [resolvable:$true] %s16
      %s18 = sshll.u32 [#allocation5], 4
      %s19 = int_to_ptr.vmem [resolvable:$true] %s18
      %21 = dma.hbm_to_vmem [thread:$0]  %s17, 128, %s19, [#allocation6]
    $region5: #{tpu_custom_call.1} parent=1 // pred_fallthru
      _
    // Predicated region
    $region6: #{tpu_custom_call.1} parent=1 // pred_check
      _
    $region7: #{tpu_custom_call.1} parent=1 // pred_check_branch
      %23 = sbr.rel (0) target = $region9
    $region8: #{tpu_custom_call.1} parent=1 // pred_region
      %25 = vsyncadd [#allocation9], 0
      %s26 = sshll.u32 %s1, 4
      %s27 = int_to_ptr.hbm [resolvable:$true] %s26
      %s28 = sshll.u32 [#allocation8], 4
      %s29 = int_to_ptr.vmem [resolvable:$true] %s28
      %34 = dma.hbm_to_vmem [thread:$0]  %s27, 2048, %s29, [#allocation9], 128, 128, 8
    $region9: #{tpu_custom_call.1} parent=1 // pred_fallthru
      _
    // Predicated region
    $region10: #{tpu_custom_call.1} parent=1 // pred_check
      _
    $region11: #{tpu_custom_call.1} parent=1 // pred_check_branch
      %36 = sbr.rel (0) target = $region13
    $region12: #{tpu_custom_call.1} parent=1 // pred_region
      _
    $region13: #{tpu_custom_call.1} parent=1 // pred_fallthru
      _
    // Predicated region
    $region14: #{tpu_custom_call.1} parent=1 // pred_check
      _
    $region15: #{tpu_custom_call.1} parent=1 // pred_check_branch
      %38 = sbr.rel (0) target = $region17
    $region16: #{tpu_custom_call.1} parent=1 // pred_region
      %40 = dma.done [#allocation6], 128
    $region17: #{tpu_custom_call.1} parent=1 // pred_fallthru
      _
    // Predicated region
    $region18: #{tpu_custom_call.1} parent=1 // pred_check
      _
    $region19: #{tpu_custom_call.1} parent=1 // pred_check_branch
      %42 = sbr.rel (0) target = $region21
    $region20: #{tpu_custom_call.1} parent=1 // pred_region
      %44 = dma.done [#allocation9], 2048
    $region21: #{tpu_custom_call.1} parent=1 // pred_fallthru
      _
    %p45 = scmp.eq.s32.totalorder 0, 0
    // Predicated region
    $region22: #{tpu_custom_call.1} parent=1 // pred_check
      %p46 = pneg %p45
    $region23: #{tpu_custom_call.1} parent=1 // pred_check_branch
      %48 = sbr.rel (%p46) target = $region25
    $region24: #{tpu_custom_call.1} parent=1 // pred_region
      %49 = vst [vmem:[#allocation2] sm:$0xff] 0.0
      %vm50 = vcmask 7168
      %51 = vst.msk [vmem:[#allocation3] sm:$0xff] %vm50, 0.0
      %52 = vst [vmem:[#allocation4] sm:$0xff] 0.0
    $region25: #{tpu_custom_call.1} parent=1 // pred_fallthru
      _
    %v53 = vld [vmem:[#allocation5] sm:$0xff]
    %v54 = vld [vmem:[#allocation8] sm:$0xff]
    %v55 = vld [vmem:[#allocation8 + $0x8] sm:$0xff]
    %v56 = vld [vmem:[#allocation8 + $0x10] sm:$0xff]
    %v57 = vld [vmem:[#allocation8 + $0x18] sm:$0xff]
    %v58 = vld [vmem:[#allocation8 + $0x20] sm:$0xff]
    %v59 = vld [vmem:[#allocation8 + $0x28] sm:$0xff]
    %v60 = vld [vmem:[#allocation8 + $0x30] sm:$0xff]
    %v61 = vld [vmem:[#allocation8 + $0x38] sm:$0xff]
    %v62 = vld [vmem:[#allocation8 + $0x40] sm:$0xff]
    %v63 = vld [vmem:[#allocation8 + $0x48] sm:$0xff]
    %v64 = vld [vmem:[#allocation8 + $0x50] sm:$0xff]
    %v65 = vld [vmem:[#allocation8 + $0x58] sm:$0xff]
    %v66 = vld [vmem:[#allocation8 + $0x60] sm:$0xff]
    %v67 = vld [vmem:[#allocation8 + $0x68] sm:$0xff]
    %v68 = vld [vmem:[#allocation8 + $0x70] sm:$0xff]
    %v69 = vld [vmem:[#allocation8 + $0x78] sm:$0xff]
    %v70 = vld [vmem:[#allocation2] sm:$0xff]
    %71 = vmatpush.xpose.msra.mxu0 %v69
    %72 = vmatpush.xpose.msra.mxu0 %v68
    %73 = vmatpush.xpose.msra.mxu0 %v67
    %74 = vmatpush.xpose.msra.mxu0 %v66
    %75 = vmatpush.xpose.msra.mxu0 %v65
    %76 = vmatpush.xpose.msra.mxu0 %v64
    %77 = vmatpush.xpose.msra.mxu0 %v63
    %78 = vmatpush.xpose.msra.mxu0 %v62
    %79 = vmatpush.xpose.msra.mxu0 %v61
    %80 = vmatpush.xpose.msra.mxu0 %v60
    %81 = vmatpush.xpose.msra.mxu0 %v59
    %82 = vmatpush.xpose.msra.mxu0 %v58
    %83 = vmatpush.xpose.msra.mxu0 %v57
    %84 = vmatpush.xpose.msra.mxu0 %v56
    %85 = vmatpush.xpose.msra.mxu0 %v55
    %86 = vmatpush.xpose.msra.mxu0 %v54
    %87 = vmatmul.f32.gmra.mxu0 %v53
    %v88 = vpop.f32.mrf.mxu0
    %v89 = vadd.f32 0.0, %v88
    %90 = vdwg.mxu0
    %v91 = vadd.f32 %v70, %v89
    %92 = vst [vmem:[#allocation2] sm:$0xff] %v91
    %v93 = vld [vmem:[#allocation3] sm:$0xff]
    %v94 = vmul.f32 %v53, %v53
    %95 = vadd.xlane.f32.xlu0 %v94
    %v96 = vpop.xlane.xlu0 %95
    %v97 = vadd.f32 %v93, %v96
    %vm98 = vcmask 7168
    %99 = vst.msk [vmem:[#allocation3] sm:$0xff] %vm98, %v97
    %v100 = vld [vmem:[#allocation4] sm:$0xff]
    %v101 = vmul.f32 %v54, %v54
    %v102 = vmul.f32 %v55, %v55
    %v103 = vmul.f32 %v56, %v56
    %v104 = vmul.f32 %v57, %v57
    %v105 = vmul.f32 %v58, %v58
    %v106 = vmul.f32 %v59, %v59
    %v107 = vmul.f32 %v60, %v60
    %v108 = vmul.f32 %v61, %v61
    %v109 = vmul.f32 %v62, %v62
    %v110 = vmul.f32 %v63, %v63
    %v111 = vmul.f32 %v64, %v64
    %v112 = vmul.f32 %v65, %v65
    %v113 = vmul.f32 %v66, %v66
    %v114 = vmul.f32 %v67, %v67
    %v115 = vmul.f32 %v68, %v68
    %v116 = vmul.f32 %v69, %v69
    %117 = vmatpush.xpose.msra.mxu0 %v116
    %118 = vmatpush.xpose.msra.mxu0 %v115
    %119 = vmatpush.xpose.msra.mxu0 %v114
    %120 = vmatpush.xpose.msra.mxu0 %v113
    %121 = vmatpush.xpose.msra.mxu0 %v112
    %122 = vmatpush.xpose.msra.mxu0 %v111
    %123 = vmatpush.xpose.msra.mxu0 %v110
    %124 = vmatpush.xpose.msra.mxu0 %v109
    %125 = vmatpush.xpose.msra.mxu0 %v108
    %126 = vmatpush.xpose.msra.mxu0 %v107
    %127 = vmatpush.xpose.msra.mxu0 %v106
    %128 = vmatpush.xpose.msra.mxu0 %v105
    %129 = vmatpush.xpose.msra.mxu0 %v104
    %130 = vmatpush.xpose.msra.mxu0 %v103
    %131 = vmatpush.xpose.msra.mxu0 %v102
    %132 = vmatpush.xpose.msra.mxu0 %v101
    %133 = vmatmul.f32.gmra.mxu0 1.0
    %v134 = vpop.f32.mrf.mxu0
    %v135 = vadd.f32 0.0, %v134
    %136 = vdwg.mxu0
    %v137 = vadd.f32 %v100, %v135
    %138 = vst [vmem:[#allocation4] sm:$0xff] %v137
    // Predicated region
    $region26: #{tpu_custom_call.1} parent=1 // pred_check
      %p139 = pneg %p45
    $region27: #{tpu_custom_call.1} parent=1 // pred_check_branch
      %141 = sbr.rel (%p139) target = $region29
    $region28: #{tpu_custom_call.1} parent=1 // pred_region
      %v142 = vld [vmem:[%s2] sm:$0x1]
      %v143 = vld [vmem:[#allocation3] sm:$0xff]
      %v144 = vrsqrt.pop %v143
      %v145 = vmul.f32 %v144, %v143
      %v146 = vmul.f32 %v145, %v144
      %v147 = vmul.f32 0.5, %v146
      %v148 = vsub.f32 1.5, %v147
      %v149 = vmul.f32 %v144, %v148
      %v150 = vmul.f32 %v143, %v149
      %vm151 = vcmp.eq.f32.partialorder %v143, inf
      %v152 = vsel %vm151, %v143, %v150
      %vm153 = vcmp.eq.f32.partialorder %v143, 0.0
      %v154 = vand.u32 %v143, 2147483648
      %v155 = vsel %vm153, %v154, %v152
      %v156 = vadd.f32 %v155, 1e-05
      %v157 = vrcp.pop %v156
      %v158 = vmul.f32 %v156, %v157
      %v159 = vsub.f32 1.0, %v158
      %v160 = vmul.f32 %v157, %v159
      %v161 = vadd.f32 %v157, %v160
      %vm162 = vweird.f32 %v156
      %vm163 = vweird.f32 %v157
      %vm164 = vmor %vm162, %vm163
      %v165 = vsel %vm164, %v157, %v161
      %v166 = vand.u32 2147483647, %v156
      %vm167 = vcmp.eq.f32.partialorder %v166, 8.507059e+37
      %v168 = vand.u32 %v156, 2147483648
      %v169 = vor.u32 1.1754944e-38, %v168
      %v170 = vsel %vm167, %v169, %v165
      %v171 = vmul.f32 1.0, %v170
      %v172 = vld [vmem:[#allocation4] sm:$0x1]
      %v173 = vrsqrt.pop %v172
      %v174 = vmul.f32 %v173, %v172
      %v175 = vmul.f32 %v174, %v173
      %v176 = vmul.f32 0.5, %v175
      %v177 = vsub.f32 1.5, %v176
      %v178 = vmul.f32 %v173, %v177
      %vm179 = vweird.f32 %v172
      %vm180 = vweird.f32 %v173
      %vm181 = vmor %vm179, %vm180
      %v182 = vsel %vm181, %v173, %v178
      %v183 = vmul.f32 %v142, 2.0
      %v184 = vmul.f32 %v183, %v182
      %v185 = vld [vmem:[#allocation2] sm:$0xff]
      %187 = vset.pattern.permute.xlu0 0
      %188 = vperm.xlu0 %187, %v171
      %v189 = vpop.permute.xlu0 %188
      %v191 = vmul.f32 %v185, %v189
      %v193 = vperm.slane %v184, 0
      %v195 = vmul.f32 %v191, %v193
      %196 = vst [vmem:[#allocation10] sm:$0xff] %v195
    $region29: #{tpu_custom_call.1} parent=1 // pred_fallthru
      _
    // Predicated region
    $region30: #{tpu_custom_call.1} parent=1 // pred_check
      _
    $region31: #{tpu_custom_call.1} parent=1 // pred_check_branch
      %198 = sbr.rel (0) target = $region33
    $region32: #{tpu_custom_call.1} parent=1 // pred_region
      %200 = vsyncadd [#allocation7], 0
      %s202 = sshll.u32 [#allocation10], 4
      %s203 = int_to_ptr.vmem [resolvable:$true] %s202
      %s204 = sshll.u32 %s3, 4
      %s205 = int_to_ptr.hbm [resolvable:$true] %s204
      %207 = dma.vmem_to_hbm [thread:$0]  %s203, 128, %s205, [#allocation7]
    $region33: #{tpu_custom_call.1} parent=1 // pred_fallthru
      _
    // Predicated region
    $region34: #{tpu_custom_call.1} parent=1 // pred_check
      _
    $region35: #{tpu_custom_call.1} parent=1 // pred_check_branch
      %209 = sbr.rel (0) target = $region37
    $region36: #{tpu_custom_call.1} parent=1 // pred_region
      %211 = dma.done [#allocation7], 128
    $region37: #{tpu_custom_call.1} parent=1 // pred_fallthru
      _
    %212 = vsyncpa [#allocation6], 1
    %213 = vsyncpa [#allocation9], 1
    %214 = vsyncpa [#allocation7], 1

</llo_original>
